<compile_context>
chip_gen: v6e
topology: v6e:2x2x1
jax: 0.10.0
libtpu: 0.0.40
codegen_flags: <defaults>
</compile_context>

<pallas_src>
import functools
import numpy as np
import jax
import jax.numpy as jnp
from jax.experimental import pallas as pl
from jax.experimental.pallas import tpu as pltpu


# ----------------------------- Pallas kernel --------------------------------

def actor_kernel(num_groups,
                 state_ref, xunf_ref, mask_ref,
                 wkc_ref, bc_ref,
                 w1s_ref, w1a_ref, b1_ref,
                 w2_ref, b2_ref,
                 w3_ref, b3_ref,
                 seg_ref,
                 out_ref):
    # ---- PastActionsNet: Conv1d(K, pad=K//2) as ONE MXU matmul (contraction K*C) ----
    conv = jax.lax.dot_general(                            # x_unf: (TB, P, K*C) already im2col'ed
        xunf_ref[...], wkc_ref[...], (((2,), (0,)), ((), ())),
        preferred_element_type=jnp.float32)                # (TB, P, C)  f32 accumulation
    conv = jnp.maximum(conv + bc_ref[...], 0.0)            # conv bias added once + ReLU
    conv = conv * mask_ref[...][:, :, None]                # zero fully-padded timesteps
    act_embed = jnp.sum(conv, axis=1)                      # (TB, C)   '... past -> ...'

    # ---- MLP (concat(state, action_embed) folded into a split W1) ----
    h = (jnp.dot(state_ref[...], w1s_ref[...], preferred_element_type=jnp.float32)
         + jnp.dot(act_embed.astype(w1a_ref.dtype), w1a_ref[...],
                   preferred_element_type=jnp.float32)
         + b1_ref[...])
    h = h * jax.nn.sigmoid(h)                              # SiLU (f32 elementwise)
    h = jnp.dot(h.astype(w2_ref.dtype), w2_ref[...],
                preferred_element_type=jnp.float32) + b2_ref[...]
    h = h * jax.nn.sigmoid(h)
    logits = jnp.dot(h.astype(w3_ref.dtype), w3_ref[...],
                     preferred_element_type=jnp.float32) + b3_ref[...]   # (TB, total_pad)

    # ---- nested (per-action-set) softmax: one segmented full-width pass ----
    seg = seg_ref[...]                                     # (1, total_pad) int32, -1 = pad col
    masks = [seg == g for g in range(num_groups)]          # computed once, reused twice
    col_max = jnp.zeros_like(logits)
    for m in masks:
        gmax = jnp.max(jnp.where(m, logits, -jnp.inf), axis=-1, keepdims=True)
        col_max = jnp.where(m, gmax, col_max)
    e = jnp.where(seg >= 0, jnp.exp(logits - col_max), 0.0)
    col_inv = jnp.zeros_like(logits)
    for m in masks:
        gsum = jnp.sum(jnp.where(m, e, 0.0), axis=-1, keepdims=True)
        col_inv = jnp.where(m, 1.0 / gsum, col_inv)        # exact: each group sums to 1
    out_ref[...] = e * col_inv                             # single lane-dense (128-mult) store


# ----------------------------- wrapper ---------------------------------------

def _single_buffer_kwargs():
    """pipeline_mode=pl.Buffered(1) for constant-index weights, when supported."""
    try:
        kw = {"pipeline_mode": pl.Buffered(1)}
        pl.BlockSpec((8, 128), lambda i: (0, 0), **kw)     # probe construction
        return kw
    except Exception:
        return {}                                          # fall back to default double buffer


def actor_forward(params, state, past_actions, num_actions, dim_action_embed,
                  conv_kernel, *, mxu_dtype=jnp.float32, batch_tile=256):
    """Returns probs of shape (B, sum(num_actions)); equivalent to Actor.forward(sample=False).

    mxu_dtype=jnp.bfloat16 halves weight + activation DMA/VMEM and uses the bf16 MXU path
    (safe on v5e/v6e/v7x); accumulation and all elementwise math remain f32.
    """
    num_actions = tuple(int(n) for n in num_actions)
    A = len(num_actions)
    C = dim_action_embed * A
    K = conv_kernel
    B, D_state = state.shape
    P = past_actions.shape[1]
    total = sum(num_actions)
    total_pad = ((total + 127) // 128) * 128               # lane-dense output width
    cd = jnp.dtype(mxu_dtype)

    # --- glue: embedding lookup + conv zero-padding + im2col (gather has no tidy Pallas path) ---
    offset = jnp.asarray(np.concatenate([[0], np.cumsum(num_actions)[:-1]]), jnp.int32)  # (A,)
    is_pad = past_actions < 0
    idx = jnp.where(is_pad, 0, past_actions + offset)                  # masked_fill(is_padding, 0)
    emb = params["embed"][idx]                                         # (B, P, A, De)
    x = emb.reshape(B, P, C).astype(jnp.float32)                       # 'b past a d -> b past (a d)'
    pad = K // 2
    x_pad = jnp.pad(x, ((0, 0), (pad, pad), (0, 0)))                   # (B, P+K-1, C)
    # wrapper-side im2col: contiguous K*C-wide rows -> efficient DMA, no in-kernel scratch
    x_unf = jnp.concatenate([x_pad[:, k:k + P, :] for k in range(K)], axis=-1)  # (B, P, K*C)
    allpad_mask = jnp.where(jnp.all(is_pad, axis=-1), 0.0, 1.0).astype(jnp.float32)  # (B, P)
    state_f = state.astype(jnp.float32)

    # --- batch tiling: TB multiple of 8, capped, sized so grid_b >= 2 when B allows (v7x 2 TCs) ---
    cap = max(8, (int(batch_tile) // 8) * 8)
    half = (((B + 1) // 2) + 7) // 8 * 8
    TB = min(cap, max(8, half))
    Bp = ((B + TB - 1) // TB) * TB
    if Bp != B:
        pb = Bp - B
        state_f = jnp.pad(state_f, ((0, pb), (0, 0)))
        x_unf = jnp.pad(x_unf, ((0, pb), (0, 0), (0, 0)))
        allpad_mask = jnp.pad(allpad_mask, ((0, pb), (0, 0)))
    grid_b = Bp // TB

    # fused per-tap conv weights: (K*C, C); row k*C + c_in  <->  conv_w[c_out, c_in, k]
    wkc = jnp.transpose(params["conv_w"], (2, 1, 0)).reshape(K * C, C)

    H1 = params["w1"].shape[1]
    H2 = params["w2"].shape[1]
    w1s = params["w1"][:D_state]                  # (D_state, H1)
    w1a = params["w1"][D_state:]                  # (C, H1)

    # pad the head to a lane-dense width (zero cols -> logits 0, masked in-kernel)
    w3p = jnp.zeros((H2, total_pad), jnp.float32).at[:, :total].set(params["w3"])
    b3p = jnp.zeros((total_pad,), jnp.float32).at[:total].set(params["b3"])

    # static segment ids for the nested softmax (-1 = padding column)
    seg_np = np.full((1, total_pad), -1, np.int32)
    off = 0
    for g, n in enumerate(num_actions):
        seg_np[0, off:off + n] = g
        off += n
    seg = jnp.asarray(seg_np)

    row = lambda v: v.reshape(1, -1).astype(jnp.float32)

    wkw = _single_buffer_kwargs()
    act2 = lambda shape: pl.BlockSpec(shape, lambda i: (i, 0))          # batch-tiled activations
    act3 = lambda shape: pl.BlockSpec(shape, lambda i: (i, 0, 0))
    wt2 = lambda shape: pl.BlockSpec(shape, lambda i: (0, 0), **wkw)    # VMEM-resident weights

    # VMEM budget: activations double-buffered, weights single-buffered (or 2x on fallback)
    isz = cd.itemsize
    act_bytes = 2 * TB * (D_state * isz + P * K * C * isz + P * 4 + total_pad * 4)
    wt_bytes = ((K * C * C + D_state * H1 + C * H1 + H1 * H2 + H2 * total_pad) * isz
                + (C + H1 + H2 + 2 * total_pad) * 4)
    wt_bytes *= (1 if wkw else 2)
    vmem_est = act_bytes + wt_bytes + (1 << 20)
    vmem_limit = min(int(1.25 * vmem_est), 128 << 20) if vmem_est > (32 << 20) else None

    kernel = functools.partial(actor_kernel, A)

    out = pl.pallas_call(
        kernel,
        out_shape=jax.ShapeDtypeStruct((Bp, total_pad), jnp.float32),
        grid=(grid_b,),
        in_specs=[
            act2((TB, D_state)),            # state tile
            act3((TB, P, K * C)),           # im2col'ed past-action embeddings tile
            act2((TB, P)),                  # all-padding mask tile
            wt2((K * C, C)),                # fused conv taps
            wt2((1, C)),                    # conv bias
            wt2((D_state, H1)),             # W1 (state part)
            wt2((C, H1)),                   # W1 (action-embed part)
            wt2((1, H1)),                   # b1
            wt2((H1, H2)),                  # W2
            wt2((1, H2)),                   # b2
            wt2((H2, total_pad)),           # W3 (lane-padded)
            wt2((1, total_pad)),            # b3 (lane-padded)
            wt2((1, total_pad)),            # softmax segment ids
        ],
        out_specs=act2((TB, total_pad)),
        compiler_params=pltpu.CompilerParams(
            dimension_semantics=("parallel",),         # megacore / v7x 2-TC sharding
            vmem_limit_bytes=vmem_limit),
    )(
        state_f.astype(cd), x_unf.astype(cd), allpad_mask,
        wkc.astype(cd), row(params["conv_b"]),
        w1s.astype(cd), w1a.astype(cd), row(params["b1"]),
        params["w2"].astype(cd), row(params["b2"]),
        w3p.astype(cd), row(b3p),
        seg,
    )
    return out[:B, :total]


# ----------------------------- params / reference ---------------------------

def make_params(key, num_actions, dims, dim_action_embed, conv_kernel):
    num_actions = tuple(num_actions)
    A = len(num_actions)
    total = sum(num_actions)
    C = dim_action_embed * A
    first, *rest = dims
    mlp_dims = (first + C, *rest, total)

    ks = jax.random.split(key, 16)

    def init(k, shape, fan_in):
        return (jax.random.normal(k, shape, jnp.float32) / np.sqrt(fan_in)).astype(jnp.float32)

    params = {
        "embed": init(ks[0], (total, dim_action_embed), dim_action_embed),
        "conv_w": init(ks[1], (C, C, conv_kernel), C * conv_kernel),
        "conv_b": init(ks[2], (C,), C),
        "w1": init(ks[3], (mlp_dims[0], mlp_dims[1]), mlp_dims[0]),
        "b1": init(ks[4], (mlp_dims[1],), mlp_dims[0]),
        "w2": init(ks[5], (mlp_dims[1], mlp_dims[2]), mlp_dims[1]),
        "b2": init(ks[6], (mlp_dims[2],), mlp_dims[1]),
        "w3": init(ks[7], (mlp_dims[2], mlp_dims[3]), mlp_dims[2]),
        "b3": init(ks[8], (mlp_dims[3],), mlp_dims[2]),
    }
    return params


def reference_forward(params, state, past_actions, num_actions, dim_action_embed, conv_kernel):
    """Pure-JAX mirror of Actor.forward(sample=False), for correctness checking."""
    num_actions = tuple(num_actions)
    A = len(num_actions)
    C = dim_action_embed * A
    K = conv_kernel
    B, P = past_actions.shape[:2]

    offset = jnp.asarray(np.concatenate([[0], np.cumsum(num_actions)[:-1]]), jnp.int32)
    is_pad = past_actions < 0
    idx = jnp.where(is_pad, 0, past_actions + offset)
    emb = params["embed"][idx].reshape(B, P, C)
    x_pad = jnp.pad(emb, ((0, 0), (K // 2, K // 2), (0, 0)))
    conv = jnp.zeros((B, P, C)) + params["conv_b"]
    for k in range(K):
        conv = conv + jnp.einsum("bpi,oi->bpo", x_pad[:, k:k + P, :], params["conv_w"][:, :, k])
    conv = jnp.maximum(conv, 0.0)
    conv = conv * jnp.where(jnp.all(is_pad, axis=-1), 0.0, 1.0)[:, :, None]
    act_embed = conv.sum(axis=1)

    h = jnp.concatenate([state, act_embed], axis=-1)
    h = jax.nn.silu(h @ params["w1"] + params["b1"])
    h = jax.nn.silu(h @ params["w2"] + params["b2"])
    logits = h @ params["w3"] + params["b3"]

    probs, off = [], 0
    for n in num_actions:
        probs.append(jax.nn.softmax(logits[:, off:off + n], axis=-1))
        off += n
    return jnp.concatenate(probs, axis=-1)


# ----------------------------- main ------------------------------------------

if __name__ == "__main__":
    # TODO(synk): sample=True branch (gumbel sampling + nested argmax + ragged log-prob
    # gather) is data-dependent over ragged groups and is left to plain JAX.
    num_actions = (3, 5)          # two action sets
    dims = (32, 32, 16)           # small analogue of the default (512, 256, 128)
    dim_action_embed = 4
    conv_kernel = 3
    B, P = 2, 4

    key = jax.random.PRNGKey(0)
    kp, ks, ka0, ka1 = jax.random.split(key, 4)

    params = make_params(kp, num_actions, dims, dim_action_embed, conv_kernel)

    state = jax.random.normal(ks, (B, dims[0]), jnp.float32)
    past_actions = jnp.stack(
        [jax.random.randint(ka0, (B, P), 0, num_actions[0]),
         jax.random.randint(ka1, (B, P), 0, num_actions[1])],
        axis=-1).astype(jnp.int32)
    # inject padding: one fully-padded timestep and one partially-padded entry
    past_actions = past_actions.at[0, P - 1, :].set(-1)
    past_actions = past_actions.at[1, 0, 0].set(-1)

    ref = reference_forward(params, state, past_actions, num_actions,
                            dim_action_embed, conv_kernel)

    # f32 MXU path
    probs = actor_forward(params, state, past_actions, num_actions,
                          dim_action_embed, conv_kernel)
    probs = jax.block_until_ready(probs)
    np.testing.assert_allclose(np.asarray(probs), np.asarray(ref), rtol=1e-3, atol=1e-3)
    # each action-set's probabilities must sum to 1 (exact normalization now)
    np.testing.assert_allclose(np.asarray(probs[:, :3].sum(-1)), 1.0, atol=1e-4)
    np.testing.assert_allclose(np.asarray(probs[:, 3:].sum(-1)), 1.0, atol=1e-4)

    # bf16 MXU operands + bf16 streamed activations (fast path on all generations);
    # accumulation + elementwise math stay f32, normalization stays exact.
    probs_bf16 = actor_forward(params, state, past_actions, num_actions,
                               dim_action_embed, conv_kernel, mxu_dtype=jnp.bfloat16)
    probs_bf16 = jax.block_until_ready(probs_bf16)
    np.testing.assert_allclose(np.asarray(probs_bf16), np.asarray(ref), rtol=0.0, atol=5e-2)
    np.testing.assert_allclose(np.asarray(probs_bf16[:, :3].sum(-1)), 1.0, atol=1e-4)
    np.testing.assert_allclose(np.asarray(probs_bf16[:, 3:].sum(-1)), 1.0, atol=1e-4)

    print("KERNEL_OK")
</pallas_src>

<mosaic_0001>
module attributes {stable_mosaic.version = 11 : i64} {
  func.func @actor_kernel(%arg0: i32, %arg1: memref<8x32xf32, #tpu.memory_space<vmem>>, %arg2: memref<8x4x24xf32, #tpu.memory_space<vmem>>, %arg3: memref<8x4xf32, #tpu.memory_space<vmem>>, %arg4: memref<24x8xf32, #tpu.memory_space<vmem>>, %arg5: memref<1x8xf32, #tpu.memory_space<vmem>>, %arg6: memref<32x32xf32, #tpu.memory_space<vmem>>, %arg7: memref<8x32xf32, #tpu.memory_space<vmem>>, %arg8: memref<1x32xf32, #tpu.memory_space<vmem>>, %arg9: memref<32x16xf32, #tpu.memory_space<vmem>>, %arg10: memref<1x16xf32, #tpu.memory_space<vmem>>, %arg11: memref<16x128xf32, #tpu.memory_space<vmem>>, %arg12: memref<1x128xf32, #tpu.memory_space<vmem>>, %arg13: memref<1x128xi32, #tpu.memory_space<vmem>>, %arg14: memref<8x128xf32, #tpu.memory_space<vmem>>) attributes {dimension_semantics = [#tpu.dimension_semantics<parallel>], iteration_bounds = array<i64: 1>, scalar_prefetch = 0 : i64, scratch_operands = 0 : i64, tpu.core_type = #tpu.core_type<tc>, window_params = [{transform_indices = @transform_0, window_bounds = array<i64: 8, 32>}, {transform_indices = @transform_1, window_bounds = array<i64: 8, 4, 24>}, {transform_indices = @transform_2, window_bounds = array<i64: 8, 4>}, {pipeline_mode = #tpu.pipeline_mode<synchronous>, transform_indices = @transform_3, window_bounds = array<i64: 24, 8>}, {pipeline_mode = #tpu.pipeline_mode<synchronous>, transform_indices = @transform_4, window_bounds = array<i64: 1, 8>}, {pipeline_mode = #tpu.pipeline_mode<synchronous>, transform_indices = @transform_5, window_bounds = array<i64: 32, 32>}, {pipeline_mode = #tpu.pipeline_mode<synchronous>, transform_indices = @transform_6, window_bounds = array<i64: 8, 32>}, {pipeline_mode = #tpu.pipeline_mode<synchronous>, transform_indices = @transform_7, window_bounds = array<i64: 1, 32>}, {pipeline_mode = #tpu.pipeline_mode<synchronous>, transform_indices = @transform_8, window_bounds = array<i64: 32, 16>}, {pipeline_mode = #tpu.pipeline_mode<synchronous>, transform_indices = @transform_9, window_bounds = array<i64: 1, 16>}, {pipeline_mode = #tpu.pipeline_mode<synchronous>, transform_indices = @transform_10, window_bounds = array<i64: 16, 128>}, {pipeline_mode = #tpu.pipeline_mode<synchronous>, transform_indices = @transform_11, window_bounds = array<i64: 1, 128>}, {pipeline_mode = #tpu.pipeline_mode<synchronous>, transform_indices = @transform_12, window_bounds = array<i64: 1, 128>}, {transform_indices = @transform_13, window_bounds = array<i64: 8, 128>}]} {
    %c0 = arith.constant 0 : index
    %c0_0 = arith.constant 0 : index
    %c0_1 = arith.constant 0 : index
    %0 = vector.load %arg2[%c0, %c0_0, %c0_1] : memref<8x4x24xf32, #tpu.memory_space<vmem>>, vector<8x4x24xf32>
    %c0_2 = arith.constant 0 : index
    %c0_3 = arith.constant 0 : index
    %1 = vector.load %arg4[%c0_2, %c0_3] : memref<24x8xf32, #tpu.memory_space<vmem>>, vector<24x8xf32>
    %cst = arith.constant dense<0.000000e+00> : vector<8x4x8xf32>
    %2 = tpu.matmul %0, %1, %cst {dimension_numbers = #tpu.dot_dimension_numbers<[2], [0], [0, 1], [1], [0, 0, 0, 1, 1, 1], [], []>} : vector<8x4x24xf32>, vector<24x8xf32>, vector<8x4x8xf32> -> vector<8x4x8xf32>
    %c0_4 = arith.constant 0 : index
    %c0_5 = arith.constant 0 : index
    %3 = vector.load %arg5[%c0_4, %c0_5] : memref<1x8xf32, #tpu.memory_space<vmem>>, vector<1x8xf32>
    %4 = vector.shape_cast %3 : vector<1x8xf32> to vector<1x1x8xf32>
    %5 = vector.broadcast %4 : vector<1x1x8xf32> to vector<8x4x8xf32>
    %6 = arith.addf %2, %5 : vector<8x4x8xf32>
    %cst_6 = arith.constant 0.000000e+00 : f32
    %7 = vector.broadcast %cst_6 : f32 to vector<8x4x8xf32>
    %8 = arith.maximumf %6, %7 : vector<8x4x8xf32>
    %c0_7 = arith.constant 0 : index
    %c0_8 = arith.constant 0 : index
    %9 = vector.load %arg3[%c0_7, %c0_8] : memref<8x4xf32, #tpu.memory_space<vmem>>, vector<8x4xf32>
    %10 = vector.shape_cast %9 : vector<8x4xf32> to vector<8x4x1xf32>
    %11 = vector.broadcast %10 : vector<8x4x1xf32> to vector<8x4x8xf32>
    %12 = arith.mulf %8, %11 : vector<8x4x8xf32>
    %cst_9 = arith.constant dense<0.000000e+00> : vector<8x8xf32>
    %13 = vector.multi_reduction <add>, %12, %cst_9 [1] : vector<8x4x8xf32> to vector<8x8xf32>
    %c0_10 = arith.constant 0 : index
    %c0_11 = arith.constant 0 : index
    %14 = vector.load %arg1[%c0_10, %c0_11] : memref<8x32xf32, #tpu.memory_space<vmem>>, vector<8x32xf32>
    %c0_12 = arith.constant 0 : index
    %c0_13 = arith.constant 0 : index
    %15 = vector.load %arg6[%c0_12, %c0_13] : memref<32x32xf32, #tpu.memory_space<vmem>>, vector<32x32xf32>
    %cst_14 = arith.constant dense<0.000000e+00> : vector<8x32xf32>
    %16 = tpu.matmul %14, %15, %cst_14 {dimension_numbers = #tpu.dot_dimension_numbers<[1], [0], [0], [1], [0, 0, 1, 1], [], []>} : vector<8x32xf32>, vector<32x32xf32>, vector<8x32xf32> -> vector<8x32xf32>
    %c0_15 = arith.constant 0 : index
    %c0_16 = arith.constant 0 : index
    %17 = vector.load %arg7[%c0_15, %c0_16] : memref<8x32xf32, #tpu.memory_space<vmem>>, vector<8x32xf32>
    %cst_17 = arith.constant dense<0.000000e+00> : vector<8x32xf32>
    %18 = tpu.matmul %13, %17, %cst_17 {dimension_numbers = #tpu.dot_dimension_numbers<[1], [0], [0], [1], [0, 0, 1, 1], [], []>} : vector<8x8xf32>, vector<8x32xf32>, vector<8x32xf32> -> vector<8x32xf32>
    %19 = arith.addf %16, %18 : vector<8x32xf32>
    %c0_18 = arith.constant 0 : index
    %c0_19 = arith.constant 0 : index
    %20 = vector.load %arg8[%c0_18, %c0_19] : memref<1x32xf32, #tpu.memory_space<vmem>>, vector<1x32xf32>
    %21 = vector.broadcast %20 : vector<1x32xf32> to vector<8x32xf32>
    %22 = arith.addf %19, %21 : vector<8x32xf32>
    %23 = arith.negf %22 : vector<8x32xf32>
    %24 = math.exp %23 : vector<8x32xf32>
    %cst_20 = arith.constant 1.000000e+00 : f32
    %25 = vector.broadcast %cst_20 : f32 to vector<8x32xf32>
    %26 = arith.addf %25, %24 : vector<8x32xf32>
    %27 = arith.divf %25, %26 : vector<8x32xf32>
    %28 = arith.mulf %22, %27 : vector<8x32xf32>
    %c0_21 = arith.constant 0 : index
    %c0_22 = arith.constant 0 : index
    %29 = vector.load %arg9[%c0_21, %c0_22] : memref<32x16xf32, #tpu.memory_space<vmem>>, vector<32x16xf32>
    %cst_23 = arith.constant dense<0.000000e+00> : vector<8x16xf32>
    %30 = tpu.matmul %28, %29, %cst_23 {dimension_numbers = #tpu.dot_dimension_numbers<[1], [0], [0], [1], [0, 0, 1, 1], [], []>} : vector<8x32xf32>, vector<32x16xf32>, vector<8x16xf32> -> vector<8x16xf32>
    %c0_24 = arith.constant 0 : index
    %c0_25 = arith.constant 0 : index
    %31 = vector.load %arg10[%c0_24, %c0_25] : memref<1x16xf32, #tpu.memory_space<vmem>>, vector<1x16xf32>
    %32 = vector.broadcast %31 : vector<1x16xf32> to vector<8x16xf32>
    %33 = arith.addf %30, %32 : vector<8x16xf32>
    %34 = arith.negf %33 : vector<8x16xf32>
    %35 = math.exp %34 : vector<8x16xf32>
    %cst_26 = arith.constant 1.000000e+00 : f32
    %36 = vector.broadcast %cst_26 : f32 to vector<8x16xf32>
    %37 = arith.addf %36, %35 : vector<8x16xf32>
    %38 = arith.divf %36, %37 : vector<8x16xf32>
    %39 = arith.mulf %33, %38 : vector<8x16xf32>
    %c0_27 = arith.constant 0 : index
    %c0_28 = arith.constant 0 : index
    %40 = vector.load %arg11[%c0_27, %c0_28] : memref<16x128xf32, #tpu.memory_space<vmem>>, vector<16x128xf32>
    %cst_29 = arith.constant dense<0.000000e+00> : vector<8x128xf32>
    %41 = tpu.matmul %39, %40, %cst_29 {dimension_numbers = #tpu.dot_dimension_numbers<[1], [0], [0], [1], [0, 0, 1, 1], [], []>} : vector<8x16xf32>, vector<16x128xf32>, vector<8x128xf32> -> vector<8x128xf32>
    %c0_30 = arith.constant 0 : index
    %c0_31 = arith.constant 0 : index
    %42 = vector.load %arg12[%c0_30, %c0_31] : memref<1x128xf32, #tpu.memory_space<vmem>>, vector<1x128xf32>
    %43 = vector.broadcast %42 : vector<1x128xf32> to vector<8x128xf32>
    %44 = arith.addf %41, %43 : vector<8x128xf32>
    %c0_32 = arith.constant 0 : index
    %c0_33 = arith.constant 0 : index
    %45 = vector.load %arg13[%c0_32, %c0_33] : memref<1x128xi32, #tpu.memory_space<vmem>>, vector<1x128xi32>
    %c0_i32 = arith.constant 0 : i32
    %46 = vector.broadcast %c0_i32 : i32 to vector<1x128xi32>
    %47 = arith.cmpi eq, %45, %46 : vector<1x128xi32>
    %c1_i32 = arith.constant 1 : i32
    %48 = vector.broadcast %c1_i32 : i32 to vector<1x128xi32>
    %49 = arith.cmpi eq, %45, %48 : vector<1x128xi32>
    %cst_34 = arith.constant 0.000000e+00 : f32
    %50 = vector.broadcast %cst_34 : f32 to vector<8x128xf32>
    %cst_35 = arith.constant 0xFF800000 : f32
    %51 = vector.shape_cast %47 : vector<1x128xi1> to vector<1x128xi1>
    %52 = vector.broadcast %51 : vector<1x128xi1> to vector<8x128xi1>
    %53 = vector.broadcast %cst_35 : f32 to vector<8x128xf32>
    %54 = arith.select %52, %44, %53 : vector<8x128xi1>, vector<8x128xf32>
    %cst_36 = arith.constant dense<0xFF800000> : vector<8xf32>
    %55 = vector.multi_reduction <maximumf>, %54, %cst_36 [1] : vector<8x128xf32> to vector<8xf32>
    %56 = vector.shape_cast %55 : vector<8xf32> to vector<8x1xf32>
    %57 = vector.shape_cast %47 : vector<1x128xi1> to vector<1x128xi1>
    %58 = vector.broadcast %57 : vector<1x128xi1> to vector<8x128xi1>
    %59 = vector.shape_cast %56 : vector<8x1xf32> to vector<8x1xf32>
    %60 = vector.broadcast %59 : vector<8x1xf32> to vector<8x128xf32>
    %61 = arith.select %58, %60, %50 : vector<8x128xi1>, vector<8x128xf32>
    %cst_37 = arith.constant 0xFF800000 : f32
    %62 = vector.shape_cast %49 : vector<1x128xi1> to vector<1x128xi1>
    %63 = vector.broadcast %62 : vector<1x128xi1> to vector<8x128xi1>
    %64 = vector.broadcast %cst_37 : f32 to vector<8x128xf32>
    %65 = arith.select %63, %44, %64 : vector<8x128xi1>, vector<8x128xf32>
    %cst_38 = arith.constant dense<0xFF800000> : vector<8xf32>
    %66 = vector.multi_reduction <maximumf>, %65, %cst_38 [1] : vector<8x128xf32> to vector<8xf32>
    %67 = vector.shape_cast %66 : vector<8xf32> to vector<8x1xf32>
    %68 = vector.shape_cast %49 : vector<1x128xi1> to vector<1x128xi1>
    %69 = vector.broadcast %68 : vector<1x128xi1> to vector<8x128xi1>
    %70 = vector.shape_cast %67 : vector<8x1xf32> to vector<8x1xf32>
    %71 = vector.broadcast %70 : vector<8x1xf32> to vector<8x128xf32>
    %72 = arith.select %69, %71, %61 : vector<8x128xi1>, vector<8x128xf32>
    %c0_i32_39 = arith.constant 0 : i32
    %73 = vector.broadcast %c0_i32_39 : i32 to vector<1x128xi32>
    %74 = arith.cmpi sge, %45, %73 : vector<1x128xi32>
    %75 = arith.subf %44, %72 : vector<8x128xf32>
    %76 = math.exp %75 : vector<8x128xf32>
    %cst_40 = arith.constant 0.000000e+00 : f32
    %77 = vector.shape_cast %74 : vector<1x128xi1> to vector<1x128xi1>
    %78 = vector.broadcast %77 : vector<1x128xi1> to vector<8x128xi1>
    %79 = vector.broadcast %cst_40 : f32 to vector<8x128xf32>
    %80 = arith.select %78, %76, %79 : vector<8x128xi1>, vector<8x128xf32>
    %cst_41 = arith.constant 0.000000e+00 : f32
    %81 = vector.broadcast %cst_41 : f32 to vector<8x128xf32>
    %cst_42 = arith.constant 0.000000e+00 : f32
    %82 = vector.shape_cast %47 : vector<1x128xi1> to vector<1x128xi1>
    %83 = vector.broadcast %82 : vector<1x128xi1> to vector<8x128xi1>
    %84 = vector.broadcast %cst_42 : f32 to vector<8x128xf32>
    %85 = arith.select %83, %80, %84 : vector<8x128xi1>, vector<8x128xf32>
    %cst_43 = arith.constant dense<0.000000e+00> : vector<8xf32>
    %86 = vector.multi_reduction <add>, %85, %cst_43 [1] : vector<8x128xf32> to vector<8xf32>
    %87 = vector.shape_cast %86 : vector<8xf32> to vector<8x1xf32>
    %cst_44 = arith.constant 1.000000e+00 : f32
    %88 = vector.broadcast %cst_44 : f32 to vector<8x1xf32>
    %89 = arith.divf %88, %87 : vector<8x1xf32>
    %90 = vector.shape_cast %47 : vector<1x128xi1> to vector<1x128xi1>
    %91 = vector.broadcast %90 : vector<1x128xi1> to vector<8x128xi1>
    %92 = vector.shape_cast %89 : vector<8x1xf32> to vector<8x1xf32>
    %93 = vector.broadcast %92 : vector<8x1xf32> to vector<8x128xf32>
    %94 = arith.select %91, %93, %81 : vector<8x128xi1>, vector<8x128xf32>
    %cst_45 = arith.constant 0.000000e+00 : f32
    %95 = vector.shape_cast %49 : vector<1x128xi1> to vector<1x128xi1>
    %96 = vector.broadcast %95 : vector<1x128xi1> to vector<8x128xi1>
    %97 = vector.broadcast %cst_45 : f32 to vector<8x128xf32>
    %98 = arith.select %96, %80, %97 : vector<8x128xi1>, vector<8x128xf32>
    %cst_46 = arith.constant dense<0.000000e+00> : vector<8xf32>
    %99 = vector.multi_reduction <add>, %98, %cst_46 [1] : vector<8x128xf32> to vector<8xf32>
    %100 = vector.shape_cast %99 : vector<8xf32> to vector<8x1xf32>
    %cst_47 = arith.constant 1.000000e+00 : f32
    %101 = vector.broadcast %cst_47 : f32 to vector<8x1xf32>
    %102 = arith.divf %101, %100 : vector<8x1xf32>
    %103 = vector.shape_cast %49 : vector<1x128xi1> to vector<1x128xi1>
    %104 = vector.broadcast %103 : vector<1x128xi1> to vector<8x128xi1>
    %105 = vector.shape_cast %102 : vector<8x1xf32> to vector<8x1xf32>
    %106 = vector.broadcast %105 : vector<8x1xf32> to vector<8x128xf32>
    %107 = arith.select %104, %106, %94 : vector<8x128xi1>, vector<8x128xf32>
    %108 = arith.mulf %80, %107 : vector<8x128xf32>
    %c0_48 = arith.constant 0 : index
    %c0_49 = arith.constant 0 : index
    %109 = vector.load %arg14[%c0_48, %c0_49] : memref<8x128xf32, #tpu.memory_space<vmem>>, vector<8x128xf32>
    tpu.vector_store %arg14[%c0_48, %c0_49], %108 {strides = array<i32>} : memref<8x128xf32, #tpu.memory_space<vmem>>, vector<8x128xf32>,
    return
  }
  func.func @transform_0(%arg0: i32) -> (i32, i32) {
    %c0_i32 = arith.constant 0 : i32
    %c0_i32_0 = arith.constant 0 : i32
    return %arg0, %c0_i32 : i32, i32
  }
  func.func @transform_1(%arg0: i32) -> (i32, i32, i32) {
    %c0_i32 = arith.constant 0 : i32
    %c0_i32_0 = arith.constant 0 : i32
    %c0_i32_1 = arith.constant 0 : i32
    return %arg0, %c0_i32, %c0_i32_0 : i32, i32, i32
  }
  func.func @transform_2(%arg0: i32) -> (i32, i32) {
    %c0_i32 = arith.constant 0 : i32
    %c0_i32_0 = arith.constant 0 : i32
    return %arg0, %c0_i32 : i32, i32
  }
  func.func @transform_3(%arg0: i32) -> (i32, i32) {
    %c0_i32 = arith.constant 0 : i32
    %c0_i32_0 = arith.constant 0 : i32
    %c0_i32_1 = arith.constant 0 : i32
    return %c0_i32, %c0_i32_0 : i32, i32
  }
  func.func @transform_4(%arg0: i32) -> (i32, i32) {
    %c0_i32 = arith.constant 0 : i32
    %c0_i32_0 = arith.constant 0 : i32
    %c0_i32_1 = arith.constant 0 : i32
    return %c0_i32, %c0_i32_0 : i32, i32
  }
  func.func @transform_5(%arg0: i32) -> (i32, i32) {
    %c0_i32 = arith.constant 0 : i32
    %c0_i32_0 = arith.constant 0 : i32
    %c0_i32_1 = arith.constant 0 : i32
    return %c0_i32, %c0_i32_0 : i32, i32
  }
  func.func @transform_6(%arg0: i32) -> (i32, i32) {
    %c0_i32 = arith.constant 0 : i32
    %c0_i32_0 = arith.constant 0 : i32
    %c0_i32_1 = arith.constant 0 : i32
    return %c0_i32, %c0_i32_0 : i32, i32
  }
  func.func @transform_7(%arg0: i32) -> (i32, i32) {
    %c0_i32 = arith.constant 0 : i32
    %c0_i32_0 = arith.constant 0 : i32
    %c0_i32_1 = arith.constant 0 : i32
    return %c0_i32, %c0_i32_0 : i32, i32
  }
  func.func @transform_8(%arg0: i32) -> (i32, i32) {
    %c0_i32 = arith.constant 0 : i32
    %c0_i32_0 = arith.constant 0 : i32
    %c0_i32_1 = arith.constant 0 : i32
    return %c0_i32, %c0_i32_0 : i32, i32
  }
  func.func @transform_9(%arg0: i32) -> (i32, i32) {
    %c0_i32 = arith.constant 0 : i32
    %c0_i32_0 = arith.constant 0 : i32
    %c0_i32_1 = arith.constant 0 : i32
    return %c0_i32, %c0_i32_0 : i32, i32
  }
  func.func @transform_10(%arg0: i32) -> (i32, i32) {
    %c0_i32 = arith.constant 0 : i32
    %c0_i32_0 = arith.constant 0 : i32
    %c0_i32_1 = arith.constant 0 : i32
    return %c0_i32, %c0_i32_0 : i32, i32
  }
  func.func @transform_11(%arg0: i32) -> (i32, i32) {
    %c0_i32 = arith.constant 0 : i32
    %c0_i32_0 = arith.constant 0 : i32
    %c0_i32_1 = arith.constant 0 : i32
    return %c0_i32, %c0_i32_0 : i32, i32
  }
  func.func @transform_12(%arg0: i32) -> (i32, i32) {
    %c0_i32 = arith.constant 0 : i32
    %c0_i32_0 = arith.constant 0 : i32
    %c0_i32_1 = arith.constant 0 : i32
    return %c0_i32, %c0_i32_0 : i32, i32
  }
  func.func @transform_13(%arg0: i32) -> (i32, i32) {
    %c0_i32 = arith.constant 0 : i32
    %c0_i32_0 = arith.constant 0 : i32
    return %arg0, %c0_i32 : i32, i32
  }
}

</mosaic_0001>

<llo_original>
// kernel: tpu_custom_call.1
$region0: #{tpu_custom_call.1}
  #allocation0 [shape = 'u32[]', space=smem, size = 0x4, offset = 0x4, fixed_abs, tag = 'smem constant byte address 0x4 - core index']
  #allocation1 [shape = 'u32[144,128]{1,0:T(1,128)}', space=vmem, size = 0x12000, scoped, tag = 'internal scratch']
  %s0 = inlined_call_operand.hbm [shape: f32[8,32], index: 0, kind: input, shape index: {}]
  %s1 = inlined_call_operand.vmem [shape: f32[8,4,24], index: 1, kind: input, shape index: {}]
  %s2 = inlined_call_operand.vmem [shape: f32[8,4], index: 2, kind: input, shape index: {}]
  %s3 = inlined_call_operand.vmem [shape: f32[24,8], index: 3, kind: input, shape index: {}]
  %s4 = inlined_call_operand.vmem [shape: f32[1,8], index: 4, kind: input, shape index: {}]
  %s5 = inlined_call_operand.vmem [shape: f32[32,32], index: 5, kind: input, shape index: {}]
  %s6 = inlined_call_operand.hbm [shape: f32[8,32], index: 6, kind: input, shape index: {}]
  %s7 = inlined_call_operand.vmem [shape: f32[1,32], index: 7, kind: input, shape index: {}]
  %s8 = inlined_call_operand.vmem [shape: f32[32,16], index: 8, kind: input, shape index: {}]
  %s9 = inlined_call_operand.vmem [shape: f32[1,16], index: 9, kind: input, shape index: {}]
  %s10 = inlined_call_operand.vmem [shape: f32[16,128], index: 10, kind: input, shape index: {}]
  %s11 = inlined_call_operand.vmem [shape: f32[1,128], index: 11, kind: input, shape index: {}]
  %s12 = inlined_call_operand.vmem [shape: s32[1,128], index: 12, kind: input, shape index: {}]
  %s13 = inlined_call_operand.hbm [shape: f32[8,128], index: 13, kind: output, shape index: {}]
  %s14 = sld [smem:[#allocation0]]
  $region70: #{tpu_custom_call.1} parent=0
    _
  %s16 = ssub.s32 1, %s14
  %s17 = scalar_select 0, %s16, %s14
  $region1: #{tpu_custom_call.1} parent=0
    #allocation2 [shape = 'u8[4096]{0}', space=vmem, size = 0x1000, scoped, tag = 'input window, operand 0, single buffered']
    #allocation3 [shape = 's32[1]{0}', space=sflag, size = 0x4, scoped, tag = 'scoped memory for tpu_custom_call.1']
    #allocation4 [shape = 's32[1]{0}', space=sflag, size = 0x4, scoped, tag = 'scoped memory for tpu_custom_call.1']
    #allocation5 [shape = 'u8[4096]{0}', space=vmem, size = 0x1000, scoped, tag = 'input window, operand 6, single buffered']
    #allocation6 [shape = 's32[1]{0}', space=sflag, size = 0x4, scoped, tag = 'scoped memory for tpu_custom_call.1']
    #allocation7 [shape = 'u8[4096]{0}', space=vmem, size = 0x1000, scoped, tag = 'output window, operand 0, single buffered']
    %18 = vsyncpa [#allocation3], 0
    %19 = vsyncpa [#allocation6], 0
    %20 = vsyncpa [#allocation4], 0
    // Predicated region
    $region2: #{tpu_custom_call.1} parent=1 // pred_check
      _
    $region3: #{tpu_custom_call.1} parent=1 // pred_check_branch
      %22 = sbr.rel (0) target = $region5
    $region4: #{tpu_custom_call.1} parent=1 // pred_region
      %s24 = ssub.s32 128, 128
      %25 = vsyncadd [#allocation3], %s24
      %s27 = sshll.u32 [#allocation2], 4
      %s28 = int_to_ptr.vmem [resolvable:$true] %s27
      %30 = dma.hbm_to_vmem [thread:$0]  %s0, 128, %s28, [#allocation3]
    $region5: #{tpu_custom_call.1} parent=1 // pred_fallthru
      _
    // Predicated region
    $region6: #{tpu_custom_call.1} parent=1 // pred_check
      _
    $region7: #{tpu_custom_call.1} parent=1 // pred_check_branch
      %32 = sbr.rel (0) target = $region9
    $region8: #{tpu_custom_call.1} parent=1 // pred_region
      _
    $region9: #{tpu_custom_call.1} parent=1 // pred_fallthru
      _
    // Predicated region
    $region10: #{tpu_custom_call.1} parent=1 // pred_check
      _
    $region11: #{tpu_custom_call.1} parent=1 // pred_check_branch
      %34 = sbr.rel (0) target = $region13
    $region12: #{tpu_custom_call.1} parent=1 // pred_region
      _
    $region13: #{tpu_custom_call.1} parent=1 // pred_fallthru
      _
    // Predicated region
    $region14: #{tpu_custom_call.1} parent=1 // pred_check
      _
    $region15: #{tpu_custom_call.1} parent=1 // pred_check_branch
      %36 = sbr.rel (0) target = $region17
    $region16: #{tpu_custom_call.1} parent=1 // pred_region
      _
    $region17: #{tpu_custom_call.1} parent=1 // pred_fallthru
      _
    // Predicated region
    $region18: #{tpu_custom_call.1} parent=1 // pred_check
      _
    $region19: #{tpu_custom_call.1} parent=1 // pred_check_branch
      %38 = sbr.rel (0) target = $region21
    $region20: #{tpu_custom_call.1} parent=1 // pred_region
      _
    $region21: #{tpu_custom_call.1} parent=1 // pred_fallthru
      _
    // Predicated region
    $region22: #{tpu_custom_call.1} parent=1 // pred_check
      _
    $region23: #{tpu_custom_call.1} parent=1 // pred_check_branch
      %40 = sbr.rel (0) target = $region25
    $region24: #{tpu_custom_call.1} parent=1 // pred_region
      _
    $region25: #{tpu_custom_call.1} parent=1 // pred_fallthru
      _
    // Predicated region
    $region26: #{tpu_custom_call.1} parent=1 // pred_check
      _
    $region27: #{tpu_custom_call.1} parent=1 // pred_check_branch
      %42 = sbr.rel (0) target = $region29
    $region28: #{tpu_custom_call.1} parent=1 // pred_region
      %s44 = ssub.s32 128, 128
      %45 = vsyncadd [#allocation6], %s44
      %s47 = sshll.u32 [#allocation5], 4
      %s48 = int_to_ptr.vmem [resolvable:$true] %s47
      %50 = dma.hbm_to_vmem [thread:$0]  %s6, 128, %s48, [#allocation6]
    $region29: #{tpu_custom_call.1} parent=1 // pred_fallthru
      _
    // Predicated region
    $region30: #{tpu_custom_call.1} parent=1 // pred_check
      _
    $region31: #{tpu_custom_call.1} parent=1 // pred_check_branch
      %52 = sbr.rel (0) target = $region33
    $region32: #{tpu_custom_call.1} parent=1 // pred_region
      _
    $region33: #{tpu_custom_call.1} parent=1 // pred_fallthru
      _
    // Predicated region
    $region34: #{tpu_custom_call.1} parent=1 // pred_check
      _
    $region35: #{tpu_custom_call.1} parent=1 // pred_check_branch
      %54 = sbr.rel (0) target = $region37
    $region36: #{tpu_custom_call.1} parent=1 // pred_region
      _
    $region37: #{tpu_custom_call.1} parent=1 // pred_fallthru
      _
    // Predicated region
    $region38: #{tpu_custom_call.1} parent=1 // pred_check
      _
    $region39: #{tpu_custom_call.1} parent=1 // pred_check_branch
      %56 = sbr.rel (0) target = $region41
    $region40: #{tpu_custom_call.1} parent=1 // pred_region
      _
    $region41: #{tpu_custom_call.1} parent=1 // pred_fallthru
      _
    // Predicated region
    $region42: #{tpu_custom_call.1} parent=1 // pred_check
      _
    $region43: #{tpu_custom_call.1} parent=1 // pred_check_branch
      %58 = sbr.rel (0) target = $region45
    $region44: #{tpu_custom_call.1} parent=1 // pred_region
      _
    $region45: #{tpu_custom_call.1} parent=1 // pred_fallthru
      _
    // Predicated region
    $region46: #{tpu_custom_call.1} parent=1 // pred_check
      _
    $region47: #{tpu_custom_call.1} parent=1 // pred_check_branch
      %60 = sbr.rel (0) target = $region49
    $region48: #{tpu_custom_call.1} parent=1 // pred_region
      _
    $region49: #{tpu_custom_call.1} parent=1 // pred_fallthru
      _
    // Predicated region
    $region50: #{tpu_custom_call.1} parent=1 // pred_check
      _
    $region51: #{tpu_custom_call.1} parent=1 // pred_check_branch
      %62 = sbr.rel (0) target = $region53
    $region52: #{tpu_custom_call.1} parent=1 // pred_region
      _
    $region53: #{tpu_custom_call.1} parent=1 // pred_fallthru
      _
    // Predicated region
    $region54: #{tpu_custom_call.1} parent=1 // pred_check
      _
    $region55: #{tpu_custom_call.1} parent=1 // pred_check_branch
      %64 = sbr.rel (0) target = $region57
    $region56: #{tpu_custom_call.1} parent=1 // pred_region
      %65 = dma.done [#allocation3], 128
    $region57: #{tpu_custom_call.1} parent=1 // pred_fallthru
      _
    // Predicated region
    $region58: #{tpu_custom_call.1} parent=1 // pred_check
      _
    $region59: #{tpu_custom_call.1} parent=1 // pred_check_branch
      %67 = sbr.rel (0) target = $region61
    $region60: #{tpu_custom_call.1} parent=1 // pred_region
      %68 = dma.done [#allocation6], 128
    $region61: #{tpu_custom_call.1} parent=1 // pred_fallthru
      _
    %v69 = vld [vmem:[%s1] sm:$0xf]
    %v70 = vld [vmem:[%s1 + $0x4] sm:$0xf]
    %v71 = vld [vmem:[%s1 + $0x8] sm:$0xf]
    %v72 = vld [vmem:[%s1 + $0xc] sm:$0xf]
    %v73 = vld [vmem:[%s1 + $0x10] sm:$0xf]
    %v74 = vld [vmem:[%s1 + $0x14] sm:$0xf]
    %v75 = vld [vmem:[%s1 + $0x18] sm:$0xf]
    %v76 = vld [vmem:[%s1 + $0x1c] sm:$0xf]
    %v77 = vld [vmem:[%s3] sm:$0xff]
    %v78 = vld [vmem:[%s3 + $0x8] sm:$0xff]
    %v79 = vld [vmem:[%s3 + $0x10] sm:$0xff]
    %v80 = vld [vmem:[%s4] sm:$0x1]
    %v82 = vlaneseq
    %v83 = vshrl.u32 %v82, 7
    %v84 = vsub.s32 0, %v83
    %v85 = vrot.slane %v80, %v84
    %v94 = vcombine.low %v69, %v70
    %v95 = vcombine.low %v71, %v72
    %v96 = vcombine.low %v73, %v74
    %v97 = vcombine.low %v75, %v76
    %v98 = vcombine.low %v85, %v85
    %vm100 = vcmask 195584
    %v101 = vsel %vm100, %v94, 0
    %v103 = vsel %vm100, %v95, 0
    %v105 = vsel %vm100, %v96, 0
    %v107 = vsel %vm100, %v97, 0
    %109 = vmatprep.subr.mxu0 0.0
    %110 = vmatpush1.msra.mxu0 0.0
    %111 = vmatprep.subr.mxu0 0.0
    %112 = vmatpush1.msra.mxu0 0.0
    %113 = vmatprep.subr.mxu0 0.0
    %114 = vmatpush1.msra.mxu0 0.0
    %115 = vmatprep.subr.mxu0 0.0
    %116 = vmatpush1.msra.mxu0 0.0
    %117 = vmatprep.subr.mxu0 0.0
    %118 = vmatpush1.msra.mxu0 0.0
    %119 = vmatprep.subr.mxu0 0.0
    %120 = vmatpush1.msra.mxu0 0.0
    %121 = vmatprep.subr.mxu0 0.0
    %122 = vmatpush1.msra.mxu0 0.0
    %123 = vmatprep.subr.mxu0 0.0
    %124 = vmatpush1.msra.mxu0 0.0
    %125 = vmatprep.subr.mxu0 0.0
    %126 = vmatpush1.msra.mxu0 0.0
    %127 = vmatprep.subr.mxu0 0.0
    %128 = vmatpush1.msra.mxu0 0.0
    %129 = vmatprep.subr.mxu0 0.0
    %130 = vmatpush1.msra.mxu0 0.0
    %131 = vmatprep.subr.mxu0 0.0
    %132 = vmatpush1.msra.mxu0 0.0
    %133 = vmatprep.subr.mxu0 0.0
    %134 = vmatpush1.msra.mxu0 0.0
    %135 = vmatprep.subr.mxu0 0.0
    %136 = vmatpush1.msra.mxu0 %v79
    %137 = vmatprep.subr.mxu0 0.0
    %138 = vmatpush1.msra.mxu0 %v78
    %139 = vmatprep.subr.mxu0 0.0
    %140 = vmatpush1.msra.mxu0 %v77
    %141 = vmatprep.subr.mxu0 0.0
    %142 = vmatpush2.msra.mxu0 0.0
    %143 = vmatprep.subr.mxu0 0.0
    %144 = vmatpush2.msra.mxu0 0.0
    %145 = vmatprep.subr.mxu0 0.0
    %146 = vmatpush2.msra.mxu0 0.0
    %147 = vmatprep.subr.mxu0 0.0
    %148 = vmatpush2.msra.mxu0 0.0
    %149 = vmatprep.subr.mxu0 0.0
    %150 = vmatpush2.msra.mxu0 0.0
    %151 = vmatprep.subr.mxu0 0.0
    %152 = vmatpush2.msra.mxu0 0.0
    %153 = vmatprep.subr.mxu0 0.0
    %154 = vmatpush2.msra.mxu0 0.0
    %155 = vmatprep.subr.mxu0 0.0
    %156 = vmatpush2.msra.mxu0 0.0
    %157 = vmatprep.subr.mxu0 0.0
    %158 = vmatpush2.msra.mxu0 0.0
    %159 = vmatprep.subr.mxu0 0.0
    %160 = vmatpush2.msra.mxu0 0.0
    %161 = vmatprep.subr.mxu0 0.0
    %162 = vmatpush2.msra.mxu0 0.0
    %163 = vmatprep.subr.mxu0 0.0
    %164 = vmatpush2.msra.mxu0 0.0
    %165 = vmatprep.subr.mxu0 0.0
    %166 = vmatpush2.msra.mxu0 0.0
    %167 = vmatprep.subr.mxu0 0.0
    %168 = vmatpush2.msra.mxu0 0.0
    %169 = vmatprep.subr.mxu0 0.0
    %170 = vmatpush2.msra.mxu0 0.0
    %171 = vmatprep.subr.mxu0 0.0
    %172 = vmatpush2.msra.mxu0 0.0
    %173 = vmatprep.mubr.f32.mxu0 0.0
    %174 = vmatmul.mubr.f32.gmra.mxu0 %v101
    %v175 = vpop.f32.mrf.mxu0
    %v176 = vadd.f32 %v98, %v175
    %v177 = vpop.f32.mrf.mxu0
    %178 = vmatprep.mubr.f32.mxu0 0.0
    %179 = vmatmul.mubr.f32.gmra.mxu0 %v103
    %v180 = vpop.f32.mrf.mxu0
    %v181 = vadd.f32 %v98, %v180
    %v182 = vpop.f32.mrf.mxu0
    %183 = vmatprep.mubr.f32.mxu0 0.0
    %184 = vmatmul.mubr.f32.gmra.mxu0 %v105
    %v185 = vpop.f32.mrf.mxu0
    %v186 = vadd.f32 %v98, %v185
    %v187 = vpop.f32.mrf.mxu0
    %188 = vmatprep.mubr.f32.mxu0 0.0
    %189 = vmatmul.mubr.f32.gmra.mxu0 %v107
    %v190 = vpop.f32.mrf.mxu0
    %v191 = vadd.f32 %v98, %v190
    %v192 = vpop.f32.mrf.mxu0
    %193 = vdwg.mxu0
    %v198 = vcombine.high %v176, %v176
    %v199 = vcombine.high %v181, %v181
    %v200 = vcombine.high %v186, %v186
    %v201 = vcombine.high %v191, %v191
    %v206 = vmax.f32 %v176, 0.0
    %v207 = vmax.f32 %v198, 0.0
    %v208 = vmax.f32 %v181, 0.0
    %v209 = vmax.f32 %v199, 0.0
    %v210 = vmax.f32 %v186, 0.0
    %v211 = vmax.f32 %v200, 0.0
    %v212 = vmax.f32 %v191, 0.0
    %v213 = vmax.f32 %v201, 0.0
    %v214 = vld [vmem:[%s2] sm:$0xff]
    %v215 = vlaneseq
    %v216 = vshrl.u32 %v215, 7
    %v217 = vsub.s32 0, %v216
    %v218 = vrot.slane %v214, %v217
    %220 = vbcast.lane.b32.xlu0 %v218, 256
    %v221 = vpop.permute.xlu0 %220
    %v222 = vlaneseq
    %v223 = vshrl.u32 %v222, 7
    %v224 = vsub.s32 1, %v223
    %v225 = vrot.slane %v214, %v224
    %227 = vbcast.lane.b32.xlu0 %v225, 256
    %v228 = vpop.permute.xlu0 %227
    %v229 = vlaneseq
    %v230 = vshrl.u32 %v229, 7
    %v231 = vsub.s32 2, %v230
    %v232 = vrot.slane %v214, %v231
    %234 = vbcast.lane.b32.xlu0 %v232, 256
    %v235 = vpop.permute.xlu0 %234
    %v236 = vlaneseq
    %v237 = vshrl.u32 %v236, 7
    %v238 = vsub.s32 3, %v237
    %v239 = vrot.slane %v214, %v238
    %241 = vbcast.lane.b32.xlu0 %v239, 256
    %v242 = vpop.permute.xlu0 %241
    %v243 = vlaneseq
    %v244 = vshrl.u32 %v243, 7
    %v245 = vsub.s32 4, %v244
    %v246 = vrot.slane %v214, %v245
    %248 = vbcast.lane.b32.xlu0 %v246, 256
    %v249 = vpop.permute.xlu0 %248
    %v250 = vlaneseq
    %v251 = vshrl.u32 %v250, 7
    %v252 = vsub.s32 5, %v251
    %v253 = vrot.slane %v214, %v252
    %255 = vbcast.lane.b32.xlu0 %v253, 256
    %v256 = vpop.permute.xlu0 %255
    %v257 = vlaneseq
    %v258 = vshrl.u32 %v257, 7
    %v259 = vsub.s32 6, %v258
    %v260 = vrot.slane %v214, %v259
    %262 = vbcast.lane.b32.xlu0 %v260, 256
    %v263 = vpop.permute.xlu0 %262
    %v264 = vlaneseq
    %v265 = vshrl.u32 %v264, 7
    %v266 = vsub.s32 7, %v265
    %v267 = vrot.slane %v214, %v266
    %269 = vbcast.lane.b32.xlu0 %v267, 256
    %v270 = vpop.permute.xlu0 %269
    %v271 = vmul.f32 %v206, %v221
    %v272 = vmul.f32 %v207, %v228
    %v273 = vmul.f32 %v208, %v235
    %v274 = vmul.f32 %v209, %v242
    %v275 = vmul.f32 %v210, %v249
    %v276 = vmul.f32 %v211, %v256
    %v277 = vmul.f32 %v212, %v263
    %v278 = vmul.f32 %v213, %v270
    %vm279 = vcmask 60416
    %v280 = vsel %vm279, %v271, 0.0
    %v281 = vrot.slane %v280, 4
    %v282 = vadd.f32 %v280, %v281
    %v283 = vrot.slane %v282, 2
    %v284 = vadd.f32 %v282, %v283
    %v285 = vrot.slane %v284, 1
    %v286 = vadd.f32 %v284, %v285
    %v287 = vsel %vm279, %v272, 0.0
    %v288 = vrot.slane %v287, 4
    %v289 = vadd.f32 %v287, %v288
    %v290 = vrot.slane %v289, 2
    %v291 = vadd.f32 %v289, %v290
    %v292 = vrot.slane %v291, 1
    %v293 = vadd.f32 %v291, %v292
    %v294 = vsel %vm279, %v273, 0.0
    %v295 = vrot.slane %v294, 4
    %v296 = vadd.f32 %v294, %v295
    %v297 = vrot.slane %v296, 2
    %v298 = vadd.f32 %v296, %v297
    %v299 = vrot.slane %v298, 1
    %v300 = vadd.f32 %v298, %v299
    %v301 = vsel %vm279, %v274, 0.0
    %v302 = vrot.slane %v301, 4
    %v303 = vadd.f32 %v301, %v302
    %v304 = vrot.slane %v303, 2
    %v305 = vadd.f32 %v303, %v304
    %v306 = vrot.slane %v305, 1
    %v307 = vadd.f32 %v305, %v306
    %v308 = vsel %vm279, %v275, 0.0
    %v309 = vrot.slane %v308, 4
    %v310 = vadd.f32 %v308, %v309
    %v311 = vrot.slane %v310, 2
    %v312 = vadd.f32 %v310, %v311
    %v313 = vrot.slane %v312, 1
    %v314 = vadd.f32 %v312, %v313
    %v315 = vsel %vm279, %v276, 0.0
    %v316 = vrot.slane %v315, 4
    %v317 = vadd.f32 %v315, %v316
    %v318 = vrot.slane %v317, 2
    %v319 = vadd.f32 %v317, %v318
    %v320 = vrot.slane %v319, 1
    %v321 = vadd.f32 %v319, %v320
    %v322 = vsel %vm279, %v277, 0.0
    %v323 = vrot.slane %v322, 4
    %v324 = vadd.f32 %v322, %v323
    %v325 = vrot.slane %v324, 2
    %v326 = vadd.f32 %v324, %v325
    %v327 = vrot.slane %v326, 1
    %v328 = vadd.f32 %v326, %v327
    %v329 = vsel %vm279, %v278, 0.0
    %v330 = vrot.slane %v329, 4
    %v331 = vadd.f32 %v329, %v330
    %v332 = vrot.slane %v331, 2
    %v333 = vadd.f32 %v331, %v332
    %v334 = vrot.slane %v333, 1
    %v335 = vadd.f32 %v333, %v334
    %v336 = vld [vmem:[#allocation2] sm:$0xff]
    %v337 = vld [vmem:[%s5] sm:$0xff]
    %v338 = vld [vmem:[%s5 + $0x8] sm:$0xff]
    %v339 = vld [vmem:[%s5 + $0x10] sm:$0xff]
    %v340 = vld [vmem:[%s5 + $0x18] sm:$0xff]
    %v341 = vld [vmem:[#allocation5] sm:$0xff]
    %vm350 = vcmask 1041409
    %v351 = vsel %vm350, %v293, %v286
    %vm352 = vcmask 1042434
    %v353 = vsel %vm352, %v300, %v351
    %vm354 = vcmask 1043459
    %v355 = vsel %vm354, %v307, %v353
    %vm356 = vcmask 1044484
    %v357 = vsel %vm356, %v314, %v355
    %vm358 = vcmask 1045509
    %v359 = vsel %vm358, %v321, %v357
    %vm360 = vcmask 1046534
    %v361 = vsel %vm360, %v328, %v359
    %vm362 = vcmask 1047559
    %v363 = vsel %vm362, %v335, %v361
    %vm364 = vcmask 64512
    %v365 = vsel %vm364, %v363, 0
    %367 = vmatprep.subr.mxu0 0.0
    %368 = vmatpush1.msra.mxu0 0.0
    %369 = vmatprep.subr.mxu0 0.0
    %370 = vmatpush1.msra.mxu0 0.0
    %371 = vmatprep.subr.mxu0 0.0
    %372 = vmatpush1.msra.mxu0 0.0
    %373 = vmatprep.subr.mxu0 0.0
    %374 = vmatpush1.msra.mxu0 0.0
    %375 = vmatprep.subr.mxu0 0.0
    %376 = vmatpush1.msra.mxu0 0.0
    %377 = vmatprep.subr.mxu0 0.0
    %378 = vmatpush1.msra.mxu0 0.0
    %379 = vmatprep.subr.mxu0 0.0
    %380 = vmatpush1.msra.mxu0 0.0
    %381 = vmatprep.subr.mxu0 0.0
    %382 = vmatpush1.msra.mxu0 0.0
    %383 = vmatprep.subr.mxu0 0.0
    %384 = vmatpush1.msra.mxu0 0.0
    %385 = vmatprep.subr.mxu0 0.0
    %386 = vmatpush1.msra.mxu0 0.0
    %387 = vmatprep.subr.mxu0 0.0
    %388 = vmatpush1.msra.mxu0 0.0
    %389 = vmatprep.subr.mxu0 0.0
    %390 = vmatpush1.msra.mxu0 0.0
    %391 = vmatprep.subr.mxu0 0.0
    %392 = vmatpush1.msra.mxu0 0.0
    %393 = vmatprep.subr.mxu0 0.0
    %394 = vmatpush1.msra.mxu0 0.0
    %395 = vmatprep.subr.mxu0 0.0
    %396 = vmatpush1.msra.mxu0 0.0
    %397 = vmatprep.subr.mxu0 0.0
    %398 = vmatpush1.msra.mxu0 %v341
    %399 = vmatprep.subr.mxu0 0.0
    %400 = vmatpush2.msra.mxu0 0.0
    %401 = vmatprep.subr.mxu0 0.0
    %402 = vmatpush2.msra.mxu0 0.0
    %403 = vmatprep.subr.mxu0 0.0
    %404 = vmatpush2.msra.mxu0 0.0
    %405 = vmatprep.subr.mxu0 0.0
    %406 = vmatpush2.msra.mxu0 0.0
    %407 = vmatprep.subr.mxu0 0.0
    %408 = vmatpush2.msra.mxu0 0.0
    %409 = vmatprep.subr.mxu0 0.0
    %410 = vmatpush2.msra.mxu0 0.0
    %411 = vmatprep.subr.mxu0 0.0
    %412 = vmatpush2.msra.mxu0 0.0
    %413 = vmatprep.subr.mxu0 0.0
    %414 = vmatpush2.msra.mxu0 0.0
    %415 = vmatprep.subr.mxu0 0.0
    %416 = vmatpush2.msra.mxu0 0.0
    %417 = vmatprep.subr.mxu0 0.0
    %418 = vmatpush2.msra.mxu0 0.0
    %419 = vmatprep.subr.mxu0 0.0
    %420 = vmatpush2.msra.mxu0 0.0
    %421 = vmatprep.subr.mxu0 0.0
    %422 = vmatpush2.msra.mxu0 0.0
    %423 = vmatprep.subr.mxu0 0.0
    %424 = vmatpush2.msra.mxu0 0.0
    %425 = vmatprep.subr.mxu0 0.0
    %426 = vmatpush2.msra.mxu0 0.0
    %427 = vmatprep.subr.mxu0 0.0
    %428 = vmatpush2.msra.mxu0 0.0
    %429 = vmatprep.subr.mxu0 0.0
    %430 = vmatpush2.msra.mxu0 0.0
    %431 = vmatprep.mubr.f32.mxu0 0.0
    %432 = vmatmul.mubr.f32.gmra.mxu0 %v365
    %v433 = vpop.f32.mrf.mxu0
    %v434 = vadd.f32 0.0, %v433
    %v435 = vpop.f32.mrf.mxu0
    %436 = vdwg.mxu0
    %vm437 = vcmask 261120
    %v439 = vsel %vm437, %v336, 0
    %441 = vmatprep.subr.mxu0 0.0
    %442 = vmatpush1.msra.mxu0 0.0
    %443 = vmatprep.subr.mxu0 0.0
    %444 = vmatpush1.msra.mxu0 0.0
    %445 = vmatprep.subr.mxu0 0.0
    %446 = vmatpush1.msra.mxu0 0.0
    %447 = vmatprep.subr.mxu0 0.0
    %448 = vmatpush1.msra.mxu0 0.0
    %449 = vmatprep.subr.mxu0 0.0
    %450 = vmatpush1.msra.mxu0 0.0
    %451 = vmatprep.subr.mxu0 0.0
    %452 = vmatpush1.msra.mxu0 0.0
    %453 = vmatprep.subr.mxu0 0.0
    %454 = vmatpush1.msra.mxu0 0.0
    %455 = vmatprep.subr.mxu0 0.0
    %456 = vmatpush1.msra.mxu0 0.0
    %457 = vmatprep.subr.mxu0 0.0
    %458 = vmatpush1.msra.mxu0 0.0
    %459 = vmatprep.subr.mxu0 0.0
    %460 = vmatpush1.msra.mxu0 0.0
    %461 = vmatprep.subr.mxu0 0.0
    %462 = vmatpush1.msra.mxu0 0.0
    %463 = vmatprep.subr.mxu0 0.0
    %464 = vmatpush1.msra.mxu0 0.0
    %465 = vmatprep.subr.mxu0 0.0
    %466 = vmatpush1.msra.mxu0 %v340
    %467 = vmatprep.subr.mxu0 0.0
    %468 = vmatpush1.msra.mxu0 %v339
    %469 = vmatprep.subr.mxu0 0.0
    %470 = vmatpush1.msra.mxu0 %v338
    %471 = vmatprep.subr.mxu0 0.0
    %472 = vmatpush1.msra.mxu0 %v337
    %473 = vmatprep.subr.mxu0 0.0
    %474 = vmatpush2.msra.mxu0 0.0
    %475 = vmatprep.subr.mxu0 0.0
    %476 = vmatpush2.msra.mxu0 0.0
    %477 = vmatprep.subr.mxu0 0.0
    %478 = vmatpush2.msra.mxu0 0.0
    %479 = vmatprep.subr.mxu0 0.0
    %480 = vmatpush2.msra.mxu0 0.0
    %481 = vmatprep.subr.mxu0 0.0
    %482 = vmatpush2.msra.mxu0 0.0
    %483 = vmatprep.subr.mxu0 0.0
    %484 = vmatpush2.msra.mxu0 0.0
    %485 = vmatprep.subr.mxu0 0.0
    %486 = vmatpush2.msra.mxu0 0.0
    %487 = vmatprep.subr.mxu0 0.0
    %488 = vmatpush2.msra.mxu0 0.0
    %489 = vmatprep.subr.mxu0 0.0
    %490 = vmatpush2.msra.mxu0 0.0
    %491 = vmatprep.subr.mxu0 0.0
    %492 = vmatpush2.msra.mxu0 0.0
    %493 = vmatprep.subr.mxu0 0.0
    %494 = vmatpush2.msra.mxu0 0.0
    %495 = vmatprep.subr.mxu0 0.0
    %496 = vmatpush2.msra.mxu0 0.0
    %497 = vmatprep.subr.mxu0 0.0
    %498 = vmatpush2.msra.mxu0 0.0
    %499 = vmatprep.subr.mxu0 0.0
    %500 = vmatpush2.msra.mxu0 0.0
    %501 = vmatprep.subr.mxu0 0.0
    %502 = vmatpush2.msra.mxu0 0.0
    %503 = vmatprep.subr.mxu0 0.0
    %504 = vmatpush2.msra.mxu0 0.0
    %505 = vmatprep.mubr.f32.mxu0 0.0
    %506 = vmatmul.mubr.f32.gmra.mxu0 %v439
    %v507 = vpop.f32.mrf.mxu0
    %v508 = vadd.f32 %v434, %v507
    %v509 = vpop.f32.mrf.mxu0
    %510 = vdwg.mxu0
    %v511 = vld [vmem:[%s7] sm:$0x1]
    %v513 = vlaneseq
    %v514 = vshrl.u32 %v513, 7
    %v515 = vsub.s32 0, %v514
    %v516 = vrot.slane %v511, %v515
    %v518 = vadd.f32 %v508, %v516
    %v519 = vxor.u32 %v518, 2147483648
    %v520 = vmul.f32 %v519, 1.442695
    %v521 = vpow.pop %v520
    %v522 = vadd.f32 %v521, 1.0
    %v523 = vrcp.pop %v522
    %v524 = vmul.f32 1.0, %v523
    %v525 = vmul.f32 %v518, %v524
    %v526 = vld [vmem:[%s8] sm:$0xff]
    %v527 = vld [vmem:[%s8 + $0x8] sm:$0xff]
    %v528 = vld [vmem:[%s8 + $0x10] sm:$0xff]
    %v529 = vld [vmem:[%s8 + $0x18] sm:$0xff]
    %v530 = vld [vmem:[%s9] sm:$0x1]
    %v532 = vlaneseq
    %v533 = vshrl.u32 %v532, 7
    %v534 = vsub.s32 0, %v533
    %v535 = vrot.slane %v530, %v534
    %v538 = vsel %vm437, %v525, 0
    %540 = vmatprep.subr.mxu0 0.0
    %541 = vmatpush1.msra.mxu0 0.0
    %542 = vmatprep.subr.mxu0 0.0
    %543 = vmatpush1.msra.mxu0 0.0
    %544 = vmatprep.subr.mxu0 0.0
    %545 = vmatpush1.msra.mxu0 0.0
    %546 = vmatprep.subr.mxu0 0.0
    %547 = vmatpush1.msra.mxu0 0.0
    %548 = vmatprep.subr.mxu0 0.0
    %549 = vmatpush1.msra.mxu0 0.0
    %550 = vmatprep.subr.mxu0 0.0
    %551 = vmatpush1.msra.mxu0 0.0
    %552 = vmatprep.subr.mxu0 0.0
    %553 = vmatpush1.msra.mxu0 0.0
    %554 = vmatprep.subr.mxu0 0.0
    %555 = vmatpush1.msra.mxu0 0.0
    %556 = vmatprep.subr.mxu0 0.0
    %557 = vmatpush1.msra.mxu0 0.0
    %558 = vmatprep.subr.mxu0 0.0
    %559 = vmatpush1.msra.mxu0 0.0
    %560 = vmatprep.subr.mxu0 0.0
    %561 = vmatpush1.msra.mxu0 0.0
    %562 = vmatprep.subr.mxu0 0.0
    %563 = vmatpush1.msra.mxu0 0.0
    %564 = vmatprep.subr.mxu0 0.0
    %565 = vmatpush1.msra.mxu0 %v529
    %566 = vmatprep.subr.mxu0 0.0
    %567 = vmatpush1.msra.mxu0 %v528
    %568 = vmatprep.subr.mxu0 0.0
    %569 = vmatpush1.msra.mxu0 %v527
    %570 = vmatprep.subr.mxu0 0.0
    %571 = vmatpush1.msra.mxu0 %v526
    %572 = vmatprep.subr.mxu0 0.0
    %573 = vmatpush2.msra.mxu0 0.0
    %574 = vmatprep.subr.mxu0 0.0
    %575 = vmatpush2.msra.mxu0 0.0
    %576 = vmatprep.subr.mxu0 0.0
    %577 = vmatpush2.msra.mxu0 0.0
    %578 = vmatprep.subr.mxu0 0.0
    %579 = vmatpush2.msra.mxu0 0.0
    %580 = vmatprep.subr.mxu0 0.0
    %581 = vmatpush2.msra.mxu0 0.0
    %582 = vmatprep.subr.mxu0 0.0
    %583 = vmatpush2.msra.mxu0 0.0
    %584 = vmatprep.subr.mxu0 0.0
    %585 = vmatpush2.msra.mxu0 0.0
    %586 = vmatprep.subr.mxu0 0.0
    %587 = vmatpush2.msra.mxu0 0.0
    %588 = vmatprep.subr.mxu0 0.0
    %589 = vmatpush2.msra.mxu0 0.0
    %590 = vmatprep.subr.mxu0 0.0
    %591 = vmatpush2.msra.mxu0 0.0
    %592 = vmatprep.subr.mxu0 0.0
    %593 = vmatpush2.msra.mxu0 0.0
    %594 = vmatprep.subr.mxu0 0.0
    %595 = vmatpush2.msra.mxu0 0.0
    %596 = vmatprep.subr.mxu0 0.0
    %597 = vmatpush2.msra.mxu0 0.0
    %598 = vmatprep.subr.mxu0 0.0
    %599 = vmatpush2.msra.mxu0 0.0
    %600 = vmatprep.subr.mxu0 0.0
    %601 = vmatpush2.msra.mxu0 0.0
    %602 = vmatprep.subr.mxu0 0.0
    %603 = vmatpush2.msra.mxu0 0.0
    %604 = vmatprep.mubr.f32.mxu0 0.0
    %605 = vmatmul.mubr.f32.gmra.mxu0 %v538
    %v606 = vpop.f32.mrf.mxu0
    %v607 = vadd.f32 %v535, %v606
    %v608 = vpop.f32.mrf.mxu0
    %609 = vdwg.mxu0
    %v610 = vxor.u32 %v607, 2147483648
    %v611 = vmul.f32 %v610, 1.442695
    %v612 = vpow.pop %v611
    %v613 = vadd.f32 %v612, 1.0
    %v614 = vrcp.pop %v613
    %v615 = vmul.f32 1.0, %v614
    %v616 = vmul.f32 %v607, %v615
    %v617 = vld [vmem:[%s10] sm:$0xff]
    %v618 = vld [vmem:[%s10 + $0x8] sm:$0xff]
    %v619 = vld [vmem:[%s11] sm:$0x1]
    %v621 = vlaneseq
    %v622 = vshrl.u32 %v621, 7
    %v623 = vsub.s32 0, %v622
    %v624 = vrot.slane %v619, %v623
    %vm626 = vcmask 130048
    %v628 = vsel %vm626, %v616, 0
    %630 = vmatprep.subr.mxu0 0.0
    %631 = vmatpush1.msra.mxu0 0.0
    %632 = vmatprep.subr.mxu0 0.0
    %633 = vmatpush1.msra.mxu0 0.0
    %634 = vmatprep.subr.mxu0 0.0
    %635 = vmatpush1.msra.mxu0 0.0
    %636 = vmatprep.subr.mxu0 0.0
    %637 = vmatpush1.msra.mxu0 0.0
    %638 = vmatprep.subr.mxu0 0.0
    %639 = vmatpush1.msra.mxu0 0.0
    %640 = vmatprep.subr.mxu0 0.0
    %641 = vmatpush1.msra.mxu0 0.0
    %642 = vmatprep.subr.mxu0 0.0
    %643 = vmatpush1.msra.mxu0 0.0
    %644 = vmatprep.subr.mxu0 0.0
    %645 = vmatpush1.msra.mxu0 0.0
    %646 = vmatprep.subr.mxu0 0.0
    %647 = vmatpush1.msra.mxu0 0.0
    %648 = vmatprep.subr.mxu0 0.0
    %649 = vmatpush1.msra.mxu0 0.0
    %650 = vmatprep.subr.mxu0 0.0
    %651 = vmatpush1.msra.mxu0 0.0
    %652 = vmatprep.subr.mxu0 0.0
    %653 = vmatpush1.msra.mxu0 0.0
    %654 = vmatprep.subr.mxu0 0.0
    %655 = vmatpush1.msra.mxu0 0.0
    %656 = vmatprep.subr.mxu0 0.0
    %657 = vmatpush1.msra.mxu0 0.0
    %658 = vmatprep.subr.mxu0 0.0
    %659 = vmatpush1.msra.mxu0 %v618
    %660 = vmatprep.subr.mxu0 0.0
    %661 = vmatpush1.msra.mxu0 %v617
    %662 = vmatprep.subr.mxu0 0.0
    %663 = vmatpush2.msra.mxu0 0.0
    %664 = vmatprep.subr.mxu0 0.0
    %665 = vmatpush2.msra.mxu0 0.0
    %666 = vmatprep.subr.mxu0 0.0
    %667 = vmatpush2.msra.mxu0 0.0
    %668 = vmatprep.subr.mxu0 0.0
    %669 = vmatpush2.msra.mxu0 0.0
    %670 = vmatprep.subr.mxu0 0.0
    %671 = vmatpush2.msra.mxu0 0.0
    %672 = vmatprep.subr.mxu0 0.0
    %673 = vmatpush2.msra.mxu0 0.0
    %674 = vmatprep.subr.mxu0 0.0
    %675 = vmatpush2.msra.mxu0 0.0
    %676 = vmatprep.subr.mxu0 0.0
    %677 = vmatpush2.msra.mxu0 0.0
    %678 = vmatprep.subr.mxu0 0.0
    %679 = vmatpush2.msra.mxu0 0.0
    %680 = vmatprep.subr.mxu0 0.0
    %681 = vmatpush2.msra.mxu0 0.0
    %682 = vmatprep.subr.mxu0 0.0
    %683 = vmatpush2.msra.mxu0 0.0
    %684 = vmatprep.subr.mxu0 0.0
    %685 = vmatpush2.msra.mxu0 0.0
    %686 = vmatprep.subr.mxu0 0.0
    %687 = vmatpush2.msra.mxu0 0.0
    %688 = vmatprep.subr.mxu0 0.0
    %689 = vmatpush2.msra.mxu0 0.0
    %690 = vmatprep.subr.mxu0 0.0
    %691 = vmatpush2.msra.mxu0 0.0
    %692 = vmatprep.subr.mxu0 0.0
    %693 = vmatpush2.msra.mxu0 0.0
    %694 = vmatprep.mubr.f32.mxu0 0.0
    %695 = vmatmul.mubr.f32.gmra.mxu0 %v628
    %v696 = vpop.f32.mrf.mxu0
    %v697 = vadd.f32 %v624, %v696
    %v698 = vpop.f32.mrf.mxu0
    %699 = vdwg.mxu0
    %v700 = vld [vmem:[%s12] sm:$0x1]
    %vm701 = vcmp.eq.s32.totalorder %v700, 0
    %vm702 = vcmp.eq.s32.totalorder %v700, 1
    %v703 = vsel %vm701, 1, 0
    %v704 = vlaneseq
    %v705 = vshrl.u32 %v704, 7
    %v706 = vsub.s32 0, %v705
    %v707 = vrot.slane %v703, %v706
    %vm708 = vcmp.eq.s32.totalorder %v707, 1
    %v709 = vsel %vm708, %v697, -inf
    %710 = vmax.xlane.f32.xlu0 %v709
    %v711 = vpop.xlane.xlu0 %710
    %v712 = vsel %vm708, %v711, 0.0
    %v713 = vsel %vm702, 1, 0
    %v714 = vlaneseq
    %v715 = vshrl.u32 %v714, 7
    %v716 = vsub.s32 0, %v715
    %v717 = vrot.slane %v713, %v716
    %vm718 = vcmp.eq.s32.totalorder %v717, 1
    %v719 = vsel %vm718, %v697, -inf
    %720 = vmax.xlane.f32.xlu0 %v719
    %v721 = vpop.xlane.xlu0 %720
    %v722 = vsel %vm718, %v721, %v712
    %vm723 = vcmp.ge.s32.totalorder %v700, 0
    %v724 = vsub.f32 %v697, %v722
    %v725 = vmul.f32 %v724, 1.442695
    %v726 = vpow.pop %v725
    %v727 = vsel %vm723, 1, 0
    %v728 = vlaneseq
    %v729 = vshrl.u32 %v728, 7
    %v730 = vsub.s32 0, %v729
    %v731 = vrot.slane %v727, %v730
    %vm732 = vcmp.eq.s32.totalorder %v731, 1
    %v733 = vsel %vm732, %v726, 0.0
    %v734 = vsel %vm708, %v733, 0.0
    %735 = vadd.xlane.f32.xlu0 %v734
    %v736 = vpop.xlane.xlu0 %735
    %v737 = vrcp.pop %v736
    %v738 = vmul.f32 1.0, %v737
    %v739 = vsel %vm708, %v738, 0.0
    %v740 = vsel %vm718, %v733, 0.0
    %741 = vadd.xlane.f32.xlu0 %v740
    %v742 = vpop.xlane.xlu0 %741
    %v743 = vrcp.pop %v742
    %v744 = vmul.f32 1.0, %v743
    %v745 = vsel %vm718, %v744, %v739
    %v746 = vmul.f32 %v733, %v745
    %747 = vst [vmem:[#allocation7] sm:$0xff] %v746
    // Predicated region
    $region62: #{tpu_custom_call.1} parent=1 // pred_check
      _
    $region63: #{tpu_custom_call.1} parent=1 // pred_check_branch
      %749 = sbr.rel (0) target = $region65
    $region64: #{tpu_custom_call.1} parent=1 // pred_region
      %s751 = ssub.s32 128, 128
      %752 = vsyncadd [#allocation4], %s751
      %s754 = sshll.u32 [#allocation7], 4
      %s755 = int_to_ptr.vmem [resolvable:$true] %s754
      %757 = dma.vmem_to_hbm [thread:$0]  %s755, 128, %s13, [#allocation4]
    $region65: #{tpu_custom_call.1} parent=1 // pred_fallthru
      _
    // Predicated region
    $region66: #{tpu_custom_call.1} parent=1 // pred_check
      _
    $region67: #{tpu_custom_call.1} parent=1 // pred_check_branch
      %759 = sbr.rel (0) target = $region69
    $region68: #{tpu_custom_call.1} parent=1 // pred_region
      %760 = dma.done [#allocation4], 128
    $region69: #{tpu_custom_call.1} parent=1 // pred_fallthru
      _
    %761 = vsyncpa [#allocation3], 1
    %762 = vsyncpa [#allocation6], 1
    %763 = vsyncpa [#allocation4], 1

</llo_original>
